<compile_context>
chip_gen: v6e
topology: v6e:2x2x1
jax: 0.10.0
libtpu: 0.0.40
codegen_flags: <defaults>
</compile_context>

<pallas_src>
import functools
import math

import jax
import jax.numpy as jnp
import numpy as np
from jax.experimental import pallas as pl
from jax.experimental.pallas import tpu as pltpu


# ----------------------------------------------------------------------------
# Kernels
# ----------------------------------------------------------------------------
def _pe_add_kernel(x_ref, pe_ref, o_ref):
    # x: (ts, B, D);  pe: (ts, 1, D) broadcast over the batch dimension.
    o_ref[...] = (x_ref[...] + pe_ref[...]).astype(o_ref.dtype)


def _pe_add_dropout_kernel(x_ref, pe_ref, rnd_ref, o_ref, *, p):
    # Fused: (x + pe) -> dropout mask -> rescale.  rnd is uniform in [0, 1).
    y = (x_ref[...] + pe_ref[...]).astype(jnp.float32)
    keep = rnd_ref[...] >= jnp.float32(p)
    scale = jnp.float32(1.0 / (1.0 - p))
    o_ref[...] = jnp.where(keep, y * scale, jnp.float32(0.0)).astype(o_ref.dtype)


# ----------------------------------------------------------------------------
# Wrapper
# ----------------------------------------------------------------------------
def _pick_seq_tile(seq_len, max_block_rows=128):
    """Largest tile (multiple of 8 sublanes, divides seq_len) <= max_block_rows."""
    if seq_len <= max_block_rows:
        return seq_len
    for cand in range(max_block_rows, 0, -1):
        if cand % 8 == 0 and seq_len % cand == 0:
            return cand
    return seq_len  # fall back to a single (un-tiled) block


def positional_encoding_forward(x, pe, *, p=0.1, training=False, rng_key=None):
    """x: (S, B, D); pe: (max_len, 1, D), max_len >= S.  Returns (S, B, D)."""
    S, B, D = x.shape
    ts = _pick_seq_tile(S)
    grid = (S // ts,)

    x_spec = pl.BlockSpec((ts, B, D), lambda i: (i, 0, 0))
    pe_spec = pl.BlockSpec((ts, 1, D), lambda i: (i, 0, 0))  # fuses pe[:S] slice
    out_spec = pl.BlockSpec((ts, B, D), lambda i: (i, 0, 0))
    cparams = pltpu.CompilerParams(dimension_semantics=("parallel",))
    out_shape = jax.ShapeDtypeStruct(x.shape, x.dtype)

    if (not training) or p == 0.0:
        return pl.pallas_call(
            _pe_add_kernel,
            out_shape=out_shape,
            grid=grid,
            in_specs=[x_spec, pe_spec],
            out_specs=out_spec,
            compiler_params=cparams,
        )(x, pe)

    if rng_key is None:
        rng_key = jax.random.PRNGKey(0)
    # Uniform randoms generated outside the kernel (portable to interpret
    # mode); masking + rescaling still happens fused inside the kernel.
    rnd = jax.random.uniform(rng_key, x.shape, dtype=jnp.float32)

    return pl.pallas_call(
        functools.partial(_pe_add_dropout_kernel, p=float(p)),
        out_shape=out_shape,
        grid=grid,
        in_specs=[x_spec, pe_spec, x_spec],
        out_specs=out_spec,
        compiler_params=cparams,
    )(x, pe, rnd)


# ----------------------------------------------------------------------------
# Deterministic sinusoidal table (matches the PyTorch buffer construction)
# ----------------------------------------------------------------------------
def make_sinusoidal_pe(max_len, d_model):
    pe = np.zeros((max_len, d_model), dtype=np.float32)
    position = np.arange(0, max_len, dtype=np.float32)[:, None]
    div_term = np.exp(np.arange(0, d_model, 2, dtype=np.float32)
                      * (-math.log(10000.0) / d_model))
    pe[:, 0::2] = np.sin(position * div_term)
    pe[:, 1::2] = np.cos(position * div_term)
    return jnp.asarray(pe)[:, None, :]            # (max_len, 1, D)


if __name__ == "__main__":
    d_model = 128          # lane-dense last dim (multiple of 128)
    max_len = 512
    batch = 8              # full f32 sublane tile

    pe = make_sinusoidal_pe(max_len, d_model)

    key = jax.random.PRNGKey(0)
    k1, k2, k3 = jax.random.split(key, 3)

    # --- case 1: small, single-block (eval / inference forward) ---
    S1 = 16
    x1 = jax.random.normal(k1, (S1, batch, d_model), jnp.float32)
    out1 = jax.block_until_ready(positional_encoding_forward(x1, pe))
    ref1 = np.asarray(x1) + np.asarray(pe)[:S1]
    assert out1.shape == (S1, batch, d_model), out1.shape
    np.testing.assert_allclose(np.asarray(out1), ref1, rtol=1e-6, atol=1e-6)

    # --- case 2: longer sequence, multi-block pipelined over the seq axis ---
    S2 = 64
    x2 = jax.random.normal(k2, (S2, batch, d_model), jnp.float32)
    out2 = jax.block_until_ready(positional_encoding_forward(x2, pe))
    ref2 = np.asarray(x2) + np.asarray(pe)[:S2]
    np.testing.assert_allclose(np.asarray(out2), ref2, rtol=1e-6, atol=1e-6)

    # --- case 3: training-mode forward (fused dropout inside the kernel) ---
    p = 0.1
    out3 = jax.block_until_ready(
        positional_encoding_forward(x1, pe, p=p, training=True, rng_key=k3))
    o3 = np.asarray(out3)
    scaled = ref1 / (1.0 - p)
    is_zero = np.isclose(o3, 0.0, atol=1e-6)
    is_scaled = np.isclose(o3, scaled, rtol=1e-5, atol=1e-5)
    # Every element is either dropped (0) or kept-and-rescaled by 1/(1-p).
    assert np.all(is_zero | is_scaled)
    frac_dropped = float(is_zero.mean())
    assert 0.02 < frac_dropped < 0.3, frac_dropped   # expected ~= p = 0.1

    print("KERNEL_OK")
</pallas_src>

<mosaic_0001>
module attributes {stable_mosaic.version = 11 : i64} {
  func.func @_pe_add_kernel(%arg0: i32, %arg1: memref<16x8x128xf32, #tpu.memory_space<vmem>>, %arg2: memref<16x1x128xf32, #tpu.memory_space<vmem>>, %arg3: memref<16x8x128xf32, #tpu.memory_space<vmem>>) attributes {dimension_semantics = [#tpu.dimension_semantics<parallel>], iteration_bounds = array<i64: 1>, scalar_prefetch = 0 : i64, scratch_operands = 0 : i64, tpu.core_type = #tpu.core_type<tc>, window_params = [{transform_indices = @transform_0, window_bounds = array<i64: 16, 8, 128>}, {transform_indices = @transform_1, window_bounds = array<i64: 16, 1, 128>}, {transform_indices = @transform_2, window_bounds = array<i64: 16, 8, 128>}]} {
    %c0 = arith.constant 0 : index
    %c0_0 = arith.constant 0 : index
    %c0_1 = arith.constant 0 : index
    %0 = vector.load %arg1[%c0, %c0_0, %c0_1] : memref<16x8x128xf32, #tpu.memory_space<vmem>>, vector<16x8x128xf32>
    %c0_2 = arith.constant 0 : index
    %c0_3 = arith.constant 0 : index
    %c0_4 = arith.constant 0 : index
    %1 = vector.load %arg2[%c0_2, %c0_3, %c0_4] : memref<16x1x128xf32, #tpu.memory_space<vmem>>, vector<16x1x128xf32>
    %2 = vector.broadcast %1 : vector<16x1x128xf32> to vector<16x8x128xf32>
    %3 = arith.addf %0, %2 : vector<16x8x128xf32>
    %c0_5 = arith.constant 0 : index
    %c0_6 = arith.constant 0 : index
    %c0_7 = arith.constant 0 : index
    %4 = vector.load %arg3[%c0_5, %c0_6, %c0_7] : memref<16x8x128xf32, #tpu.memory_space<vmem>>, vector<16x8x128xf32>
    tpu.vector_store %arg3[%c0_5, %c0_6, %c0_7], %3 {strides = array<i32>} : memref<16x8x128xf32, #tpu.memory_space<vmem>>, vector<16x8x128xf32>,
    return
  }
  func.func @transform_0(%arg0: i32) -> (i32, i32, i32) {
    %c0_i32 = arith.constant 0 : i32
    %c0_i32_0 = arith.constant 0 : i32
    %c0_i32_1 = arith.constant 0 : i32
    return %arg0, %c0_i32, %c0_i32_0 : i32, i32, i32
  }
  func.func @transform_1(%arg0: i32) -> (i32, i32, i32) {
    %c0_i32 = arith.constant 0 : i32
    %c0_i32_0 = arith.constant 0 : i32
    %c0_i32_1 = arith.constant 0 : i32
    return %arg0, %c0_i32, %c0_i32_0 : i32, i32, i32
  }
  func.func @transform_2(%arg0: i32) -> (i32, i32, i32) {
    %c0_i32 = arith.constant 0 : i32
    %c0_i32_0 = arith.constant 0 : i32
    %c0_i32_1 = arith.constant 0 : i32
    return %arg0, %c0_i32, %c0_i32_0 : i32, i32, i32
  }
}

</mosaic_0001>

<llo_original>
// kernel: tpu_custom_call.1
$region0: #{tpu_custom_call.1}
  #allocation0 [shape = 'u32[]', space=smem, size = 0x4, offset = 0x4, fixed_abs, tag = 'smem constant byte address 0x4 - core index']
  #allocation1 [shape = 'u32[144,128]{1,0:T(1,128)}', space=vmem, size = 0x12000, scoped, tag = 'internal scratch']
  %s0 = inlined_call_operand.hbm [shape: f32[16,8,128], index: 0, kind: input, shape index: {}]
  %s1 = inlined_call_operand.hbm [shape: f32[512,1,128], index: 1, kind: input, shape index: {}]
  %s2 = inlined_call_operand.hbm [shape: f32[16,8,128], index: 2, kind: output, shape index: {}]
  %s3 = sld [smem:[#allocation0]]
  $region26: #{tpu_custom_call.1} parent=0
    _
  %s5 = ssub.s32 1, %s3
  %s6 = scalar_select 0, %s5, %s3
  $region1: #{tpu_custom_call.1} parent=0
    #allocation2 [shape = 'u8[65536]{0}', space=vmem, size = 0x10000, scoped, tag = 'input window, operand 0, single buffered']
    #allocation3 [shape = 's32[1]{0}', space=sflag, size = 0x4, scoped, tag = 'scoped memory for tpu_custom_call.1']
    #allocation4 [shape = 's32[1]{0}', space=sflag, size = 0x4, scoped, tag = 'scoped memory for tpu_custom_call.1']
    #allocation5 [shape = 'u8[8192]{0}', space=vmem, size = 0x2000, scoped, tag = 'input window, operand 1, single buffered']
    #allocation6 [shape = 's32[1]{0}', space=sflag, size = 0x4, scoped, tag = 'scoped memory for tpu_custom_call.1']
    #allocation7 [shape = 'u8[65536]{0}', space=vmem, size = 0x10000, scoped, tag = 'output window, operand 0, single buffered']
    %7 = vsyncpa [#allocation3], 0
    %8 = vsyncpa [#allocation6], 0
    %9 = vsyncpa [#allocation4], 0
    // Predicated region
    $region2: #{tpu_custom_call.1} parent=1 // pred_check
      _
    $region3: #{tpu_custom_call.1} parent=1 // pred_check_branch
      %11 = sbr.rel (0) target = $region5
    $region4: #{tpu_custom_call.1} parent=1 // pred_region
      %s13 = ssub.s32 2048, 2048
      %14 = vsyncadd [#allocation3], %s13
      %s15 = sshll.u32 [#allocation2], 4
      %s16 = int_to_ptr.vmem [resolvable:$true] %s15
      %21 = dma.hbm_to_vmem [thread:$0]  %s0, 2048, %s16, [#allocation3], 128, 128, 8
    $region5: #{tpu_custom_call.1} parent=1 // pred_fallthru
      _
    // Predicated region
    $region6: #{tpu_custom_call.1} parent=1 // pred_check
      _
    $region7: #{tpu_custom_call.1} parent=1 // pred_check_branch
      %23 = sbr.rel (0) target = $region9
    $region8: #{tpu_custom_call.1} parent=1 // pred_region
      %s25 = ssub.s32 256, 256
      %26 = vsyncadd [#allocation6], %s25
      %s27 = sshll.u32 [#allocation5], 4
      %s28 = int_to_ptr.vmem [resolvable:$true] %s27
      %33 = dma.hbm_to_vmem [thread:$0]  %s1, 256, %s28, [#allocation6], 16, 16, 1
    $region9: #{tpu_custom_call.1} parent=1 // pred_fallthru
      _
    // Predicated region
    $region10: #{tpu_custom_call.1} parent=1 // pred_check
      _
    $region11: #{tpu_custom_call.1} parent=1 // pred_check_branch
      %35 = sbr.rel (0) target = $region13
    $region12: #{tpu_custom_call.1} parent=1 // pred_region
      %36 = dma.done [#allocation3], 2048
    $region13: #{tpu_custom_call.1} parent=1 // pred_fallthru
      _
    // Predicated region
    $region14: #{tpu_custom_call.1} parent=1 // pred_check
      _
    $region15: #{tpu_custom_call.1} parent=1 // pred_check_branch
      %38 = sbr.rel (0) target = $region17
    $region16: #{tpu_custom_call.1} parent=1 // pred_region
      %39 = dma.done [#allocation6], 256
    $region17: #{tpu_custom_call.1} parent=1 // pred_fallthru
      _
    %v40 = vld [vmem:[#allocation2] sm:$0xff]
    %v41 = vld [vmem:[#allocation2 + $0x8] sm:$0xff]
    %v42 = vld [vmem:[#allocation2 + $0x10] sm:$0xff]
    %v43 = vld [vmem:[#allocation2 + $0x18] sm:$0xff]
    %v44 = vld [vmem:[#allocation2 + $0x20] sm:$0xff]
    %v45 = vld [vmem:[#allocation2 + $0x28] sm:$0xff]
    %v46 = vld [vmem:[#allocation2 + $0x30] sm:$0xff]
    %v47 = vld [vmem:[#allocation2 + $0x38] sm:$0xff]
    %v48 = vld [vmem:[#allocation2 + $0x40] sm:$0xff]
    %v49 = vld [vmem:[#allocation2 + $0x48] sm:$0xff]
    %v50 = vld [vmem:[#allocation2 + $0x50] sm:$0xff]
    %v51 = vld [vmem:[#allocation2 + $0x58] sm:$0xff]
    %v52 = vld [vmem:[#allocation2 + $0x60] sm:$0xff]
    %v53 = vld [vmem:[#allocation2 + $0x68] sm:$0xff]
    %v54 = vld [vmem:[#allocation2 + $0x70] sm:$0xff]
    %v55 = vld [vmem:[#allocation2 + $0x78] sm:$0xff]
    %v56 = vld [vmem:[#allocation5] sm:$0x1]
    %v57 = vld [vmem:[#allocation5 + $0x1] sm:$0x1]
    %v58 = vld [vmem:[#allocation5 + $0x2] sm:$0x1]
    %v59 = vld [vmem:[#allocation5 + $0x3] sm:$0x1]
    %v60 = vld [vmem:[#allocation5 + $0x4] sm:$0x1]
    %v61 = vld [vmem:[#allocation5 + $0x5] sm:$0x1]
    %v62 = vld [vmem:[#allocation5 + $0x6] sm:$0x1]
    %v63 = vld [vmem:[#allocation5 + $0x7] sm:$0x1]
    %v64 = vld [vmem:[#allocation5 + $0x8] sm:$0x1]
    %v65 = vld [vmem:[#allocation5 + $0x9] sm:$0x1]
    %v66 = vld [vmem:[#allocation5 + $0xa] sm:$0x1]
    %v67 = vld [vmem:[#allocation5 + $0xb] sm:$0x1]
    %v68 = vld [vmem:[#allocation5 + $0xc] sm:$0x1]
    %v69 = vld [vmem:[#allocation5 + $0xd] sm:$0x1]
    %v70 = vld [vmem:[#allocation5 + $0xe] sm:$0x1]
    %v71 = vld [vmem:[#allocation5 + $0xf] sm:$0x1]
    %v88 = vlaneseq
    %v89 = vshrl.u32 %v88, 7
    %v90 = vsub.s32 0, %v89
    %v91 = vrot.slane %v56, %v90
    %v92 = vlaneseq
    %v93 = vshrl.u32 %v92, 7
    %v94 = vsub.s32 0, %v93
    %v95 = vrot.slane %v57, %v94
    %v96 = vlaneseq
    %v97 = vshrl.u32 %v96, 7
    %v98 = vsub.s32 0, %v97
    %v99 = vrot.slane %v58, %v98
    %v100 = vlaneseq
    %v101 = vshrl.u32 %v100, 7
    %v102 = vsub.s32 0, %v101
    %v103 = vrot.slane %v59, %v102
    %v104 = vlaneseq
    %v105 = vshrl.u32 %v104, 7
    %v106 = vsub.s32 0, %v105
    %v107 = vrot.slane %v60, %v106
    %v108 = vlaneseq
    %v109 = vshrl.u32 %v108, 7
    %v110 = vsub.s32 0, %v109
    %v111 = vrot.slane %v61, %v110
    %v112 = vlaneseq
    %v113 = vshrl.u32 %v112, 7
    %v114 = vsub.s32 0, %v113
    %v115 = vrot.slane %v62, %v114
    %v116 = vlaneseq
    %v117 = vshrl.u32 %v116, 7
    %v118 = vsub.s32 0, %v117
    %v119 = vrot.slane %v63, %v118
    %v120 = vlaneseq
    %v121 = vshrl.u32 %v120, 7
    %v122 = vsub.s32 0, %v121
    %v123 = vrot.slane %v64, %v122
    %v124 = vlaneseq
    %v125 = vshrl.u32 %v124, 7
    %v126 = vsub.s32 0, %v125
    %v127 = vrot.slane %v65, %v126
    %v128 = vlaneseq
    %v129 = vshrl.u32 %v128, 7
    %v130 = vsub.s32 0, %v129
    %v131 = vrot.slane %v66, %v130
    %v132 = vlaneseq
    %v133 = vshrl.u32 %v132, 7
    %v134 = vsub.s32 0, %v133
    %v135 = vrot.slane %v67, %v134
    %v136 = vlaneseq
    %v137 = vshrl.u32 %v136, 7
    %v138 = vsub.s32 0, %v137
    %v139 = vrot.slane %v68, %v138
    %v140 = vlaneseq
    %v141 = vshrl.u32 %v140, 7
    %v142 = vsub.s32 0, %v141
    %v143 = vrot.slane %v69, %v142
    %v144 = vlaneseq
    %v145 = vshrl.u32 %v144, 7
    %v146 = vsub.s32 0, %v145
    %v147 = vrot.slane %v70, %v146
    %v148 = vlaneseq
    %v149 = vshrl.u32 %v148, 7
    %v150 = vsub.s32 0, %v149
    %v151 = vrot.slane %v71, %v150
    %v168 = vadd.f32 %v40, %v91
    %v169 = vadd.f32 %v41, %v95
    %v170 = vadd.f32 %v42, %v99
    %v171 = vadd.f32 %v43, %v103
    %v172 = vadd.f32 %v44, %v107
    %v173 = vadd.f32 %v45, %v111
    %v174 = vadd.f32 %v46, %v115
    %v175 = vadd.f32 %v47, %v119
    %v176 = vadd.f32 %v48, %v123
    %v177 = vadd.f32 %v49, %v127
    %v178 = vadd.f32 %v50, %v131
    %v179 = vadd.f32 %v51, %v135
    %v180 = vadd.f32 %v52, %v139
    %v181 = vadd.f32 %v53, %v143
    %v182 = vadd.f32 %v54, %v147
    %v183 = vadd.f32 %v55, %v151
    %184 = vst [vmem:[#allocation7] sm:$0xff] %v168
    %185 = vst [vmem:[#allocation7 + $0x8] sm:$0xff] %v169
    %186 = vst [vmem:[#allocation7 + $0x10] sm:$0xff] %v170
    %187 = vst [vmem:[#allocation7 + $0x18] sm:$0xff] %v171
    %188 = vst [vmem:[#allocation7 + $0x20] sm:$0xff] %v172
    %189 = vst [vmem:[#allocation7 + $0x28] sm:$0xff] %v173
    %190 = vst [vmem:[#allocation7 + $0x30] sm:$0xff] %v174
    %191 = vst [vmem:[#allocation7 + $0x38] sm:$0xff] %v175
    %192 = vst [vmem:[#allocation7 + $0x40] sm:$0xff] %v176
    %193 = vst [vmem:[#allocation7 + $0x48] sm:$0xff] %v177
    %194 = vst [vmem:[#allocation7 + $0x50] sm:$0xff] %v178
    %195 = vst [vmem:[#allocation7 + $0x58] sm:$0xff] %v179
    %196 = vst [vmem:[#allocation7 + $0x60] sm:$0xff] %v180
    %197 = vst [vmem:[#allocation7 + $0x68] sm:$0xff] %v181
    %198 = vst [vmem:[#allocation7 + $0x70] sm:$0xff] %v182
    %199 = vst [vmem:[#allocation7 + $0x78] sm:$0xff] %v183
    // Predicated region
    $region18: #{tpu_custom_call.1} parent=1 // pred_check
      _
    $region19: #{tpu_custom_call.1} parent=1 // pred_check_branch
      %201 = sbr.rel (0) target = $region21
    $region20: #{tpu_custom_call.1} parent=1 // pred_region
      %s203 = ssub.s32 2048, 2048
      %204 = vsyncadd [#allocation4], %s203
      %s205 = sshll.u32 [#allocation7], 4
      %s206 = int_to_ptr.vmem [resolvable:$true] %s205
      %211 = dma.vmem_to_hbm [thread:$0]  %s206, 2048, %s2, [#allocation4], 128, 128, 8
    $region21: #{tpu_custom_call.1} parent=1 // pred_fallthru
      _
    // Predicated region
    $region22: #{tpu_custom_call.1} parent=1 // pred_check
      _
    $region23: #{tpu_custom_call.1} parent=1 // pred_check_branch
      %213 = sbr.rel (0) target = $region25
    $region24: #{tpu_custom_call.1} parent=1 // pred_region
      %214 = dma.done [#allocation4], 2048
    $region25: #{tpu_custom_call.1} parent=1 // pred_fallthru
      _
    %215 = vsyncpa [#allocation3], 1
    %216 = vsyncpa [#allocation6], 1
    %217 = vsyncpa [#allocation4], 1

</llo_original>
